<compile_context>
chip_gen: v6e
topology: v6e:2x2x1
jax: 0.10.0
libtpu: 0.0.40
codegen_flags: <defaults>
</compile_context>

<pallas_src>
import functools

import jax
import jax.numpy as jnp
from jax.experimental import pallas as pl
from jax.experimental.pallas import tpu as pltpu

LOG_2PI = 1.8378770664093453  # log(2*pi)


def _round_up(n, m):
    return ((n + m - 1) // m) * m


def _diag_gaussian_kernel(x_ref, wm_ref, bm_ref, logstd_ref, noise_ref,
                          out_ref, *, a_dim):
    a_pad = out_ref.shape[-1]

    # Single MXU matmul; W/b columns are duplicated so lanes [0,a_dim) and
    # [a_dim,2a_dim) both hold the mean.  Lanes >= 2a_dim are zero.
    mm = jnp.dot(x_ref[...], wm_ref[...],
                 preferred_element_type=jnp.float32) + bm_ref[...]

    logstd = logstd_ref[...]                       # nonzero only in action lanes
    std = jnp.exp(logstd)                          # == 1 outside action lanes
    noise = noise_ref[...]                         # nonzero only in action lanes

    # mean lanes: mm + 1*0 == mean ; action lanes: mean + std*eps == sample.
    slab = mm + std * noise                        # (TB, a_pad)

    # Normal log_prob summed over the action dim (action lanes only).
    lane = jax.lax.broadcasted_iota(jnp.int32, (1, a_pad), 1)
    is_action = (lane >= a_dim) & (lane < 2 * a_dim)
    lp = -0.5 * (noise * noise) - logstd - 0.5 * LOG_2PI
    lp = jnp.where(is_action, lp, 0.0)
    logp = jnp.sum(lp, axis=-1, keepdims=True)     # (TB, 1)

    # Fold log_probs into the spare lane 2*a_dim of the same lane-dense slab.
    out_ref[...] = jnp.where(lane == 2 * a_dim, logp, slab)


def diag_gaussian_forward(x, params, noise, *, tb=None):
    """Returns (mean, std, action, log_probs) == materialized FixedNormal + sample."""
    B, inp_dim = x.shape
    a_dim = params["wm"].shape[1]
    a_pad = _round_up(2 * a_dim + 1, 128)    # mean | action | logp lane, padded to 128

    if tb is None:
        tb = min(512, _round_up(B, 8))       # row tile (sublane multiple of 8)
    b_pad = _round_up(B, tb)
    grid = (b_pad // tb,)

    f32 = jnp.float32
    # Zero-pad batch rows; duplicate W / b columns into the action lane region.
    xp = jnp.zeros((b_pad, inp_dim), f32).at[:B].set(x)
    noisep = jnp.zeros((b_pad, a_pad), f32).at[:B, a_dim:2 * a_dim].set(noise)
    wmp = (jnp.zeros((inp_dim, a_pad), f32)
           .at[:, :a_dim].set(params["wm"])
           .at[:, a_dim:2 * a_dim].set(params["wm"]))
    bmp = (jnp.zeros((1, a_pad), f32)
           .at[:, :a_dim].set(params["bm"])
           .at[:, a_dim:2 * a_dim].set(params["bm"]))
    logstdp = jnp.zeros((1, a_pad), f32).at[:, a_dim:2 * a_dim].set(params["logstd"])

    cost = pl.CostEstimate(
        flops=2 * b_pad * inp_dim * a_pad + 8 * b_pad * a_pad,
        transcendentals=grid[0] * a_pad,
        bytes_accessed=4 * (b_pad * inp_dim + inp_dim * a_pad + 2 * a_pad
                            + 2 * b_pad * a_pad),
    )

    kernel = functools.partial(_diag_gaussian_kernel, a_dim=a_dim)
    out_slab = pl.pallas_call(
        kernel,
        out_shape=jax.ShapeDtypeStruct((b_pad, a_pad), f32),  # mean|action|logp slab
        grid=grid,
        in_specs=[
            pl.BlockSpec((tb, inp_dim), lambda i: (i, 0)),     # x tile
            pl.BlockSpec((inp_dim, a_pad), lambda i: (0, 0)),  # W (resident)
            pl.BlockSpec((1, a_pad), lambda i: (0, 0)),        # b (resident)
            pl.BlockSpec((1, a_pad), lambda i: (0, 0)),        # logstd (resident)
            pl.BlockSpec((tb, a_pad), lambda i: (i, 0)),       # noise tile
        ],
        out_specs=pl.BlockSpec((tb, a_pad), lambda i: (i, 0)),
        compiler_params=pltpu.CompilerParams(
            dimension_semantics=("parallel",)),
        cost_estimate=cost,
    )(xp, wmp, bmp, logstdp, noisep)

    mean = out_slab[:B, :a_dim]
    action = out_slab[:B, a_dim:2 * a_dim]
    log_probs = out_slab[:B, 2 * a_dim]
    std = jnp.exp(params["logstd"])[0]       # (a_dim,), batch-invariant
    return mean, std, action, log_probs


def init_params(key, inp_dim, a_dim):
    """Matches DiagGaussian parameter shapes (weights stored (in, out) = W.t())."""
    kw, kb = jax.random.split(key, 2)
    bound = 1.0 / jnp.sqrt(inp_dim)
    wm = jax.random.uniform(kw, (inp_dim, a_dim), jnp.float32, -bound, bound)
    bm = jax.random.uniform(kb, (1, a_dim), jnp.float32, -bound, bound)
    logstd = jnp.zeros((1, a_dim), jnp.float32)   # AddBias(torch.zeros(out_dim))
    return {"wm": wm, "bm": bm, "logstd": logstd}


if __name__ == "__main__":
    key = jax.random.PRNGKey(0)
    k_param, k_x, k_noise = jax.random.split(key, 3)

    B, inp_dim, a_dim = 64, 16, 4
    params = init_params(k_param, inp_dim, a_dim)
    x = jax.random.normal(k_x, (B, inp_dim), jnp.float32)
    noise = jax.random.normal(k_noise, (B, a_dim), jnp.float32)  # eps for sample()

    mean, std, action, log_probs = diag_gaussian_forward(x, params, noise)
    jax.block_until_ready((mean, std, action, log_probs))

    assert mean.shape == (B, a_dim)
    assert std.shape == (a_dim,)
    assert action.shape == (B, a_dim)
    assert log_probs.shape == (B,)

    # Reference in plain JAX (same math as the PyTorch module).
    ref_mean = x @ params["wm"] + params["bm"]
    ref_std = jnp.exp(params["logstd"])
    ref_action = ref_mean + ref_std * noise
    ref_lp = jnp.sum(-((ref_action - ref_mean) ** 2) / (2.0 * ref_std * ref_std)
                     - params["logstd"] - 0.5 * LOG_2PI, axis=-1)

    assert jnp.allclose(mean, ref_mean, atol=1e-4), "mean mismatch"
    assert jnp.allclose(std, ref_std[0], atol=1e-6), "std mismatch"
    assert jnp.allclose(action, ref_action, atol=1e-4), "action mismatch"
    assert jnp.allclose(log_probs, ref_lp, atol=1e-4), "log_probs mismatch"

    print("KERNEL_OK")
</pallas_src>

<mosaic_0001>
module attributes {stable_mosaic.version = 11 : i64} {
  func.func @_diag_gaussian_kernel(%arg0: i32, %arg1: memref<64x16xf32, #tpu.memory_space<vmem>>, %arg2: memref<16x128xf32, #tpu.memory_space<vmem>>, %arg3: memref<1x128xf32, #tpu.memory_space<vmem>>, %arg4: memref<1x128xf32, #tpu.memory_space<vmem>>, %arg5: memref<64x128xf32, #tpu.memory_space<vmem>>, %arg6: memref<64x128xf32, #tpu.memory_space<vmem>>) attributes {dimension_semantics = [#tpu.dimension_semantics<parallel>], iteration_bounds = array<i64: 1>, scalar_prefetch = 0 : i64, scratch_operands = 0 : i64, tpu.core_type = #tpu.core_type<tc>, window_params = [{transform_indices = @transform_0, window_bounds = array<i64: 64, 16>}, {pipeline_mode = #tpu.pipeline_mode<synchronous>, transform_indices = @transform_1, window_bounds = array<i64: 16, 128>}, {pipeline_mode = #tpu.pipeline_mode<synchronous>, transform_indices = @transform_2, window_bounds = array<i64: 1, 128>}, {pipeline_mode = #tpu.pipeline_mode<synchronous>, transform_indices = @transform_3, window_bounds = array<i64: 1, 128>}, {transform_indices = @transform_4, window_bounds = array<i64: 64, 128>}, {transform_indices = @transform_5, window_bounds = array<i64: 64, 128>}]} {
    %c0 = arith.constant 0 : index
    %c0_0 = arith.constant 0 : index
    %0 = vector.load %arg1[%c0, %c0_0] : memref<64x16xf32, #tpu.memory_space<vmem>>, vector<64x16xf32>
    %c0_1 = arith.constant 0 : index
    %c0_2 = arith.constant 0 : index
    %1 = vector.load %arg2[%c0_1, %c0_2] : memref<16x128xf32, #tpu.memory_space<vmem>>, vector<16x128xf32>
    %cst = arith.constant dense<0.000000e+00> : vector<64x128xf32>
    %2 = tpu.matmul %0, %1, %cst {dimension_numbers = #tpu.dot_dimension_numbers<[1], [0], [0], [1], [0, 0, 1, 1], [], []>} : vector<64x16xf32>, vector<16x128xf32>, vector<64x128xf32> -> vector<64x128xf32>
    %c0_3 = arith.constant 0 : index
    %c0_4 = arith.constant 0 : index
    %3 = vector.load %arg3[%c0_3, %c0_4] : memref<1x128xf32, #tpu.memory_space<vmem>>, vector<1x128xf32>
    %4 = vector.broadcast %3 : vector<1x128xf32> to vector<64x128xf32>
    %5 = arith.addf %2, %4 : vector<64x128xf32>
    %c0_5 = arith.constant 0 : index
    %c0_6 = arith.constant 0 : index
    %6 = vector.load %arg4[%c0_5, %c0_6] : memref<1x128xf32, #tpu.memory_space<vmem>>, vector<1x128xf32>
    %7 = math.exp %6 : vector<1x128xf32>
    %c0_7 = arith.constant 0 : index
    %c0_8 = arith.constant 0 : index
    %8 = vector.load %arg5[%c0_7, %c0_8] : memref<64x128xf32, #tpu.memory_space<vmem>>, vector<64x128xf32>
    %9 = vector.broadcast %7 : vector<1x128xf32> to vector<64x128xf32>
    %10 = arith.mulf %9, %8 : vector<64x128xf32>
    %11 = arith.addf %5, %10 : vector<64x128xf32>
    %12 = tpu.iota {dimensions = array<i32: 1>} : vector<1x128xi32>
    %c4_i32 = arith.constant 4 : i32
    %13 = vector.broadcast %c4_i32 : i32 to vector<1x128xi32>
    %14 = arith.cmpi sge, %12, %13 : vector<1x128xi32>
    %c8_i32 = arith.constant 8 : i32
    %15 = vector.broadcast %c8_i32 : i32 to vector<1x128xi32>
    %16 = arith.cmpi slt, %12, %15 : vector<1x128xi32>
    %17 = arith.andi %14, %16 : vector<1x128xi1>
    %18 = arith.mulf %8, %8 : vector<64x128xf32>
    %cst_9 = arith.constant -5.000000e-01 : f32
    %19 = vector.broadcast %cst_9 : f32 to vector<64x128xf32>
    %20 = arith.mulf %19, %18 : vector<64x128xf32>
    %21 = vector.broadcast %6 : vector<1x128xf32> to vector<64x128xf32>
    %22 = arith.subf %20, %21 : vector<64x128xf32>
    %cst_10 = arith.constant 0.918938517 : f32
    %23 = vector.broadcast %cst_10 : f32 to vector<64x128xf32>
    %24 = arith.subf %22, %23 : vector<64x128xf32>
    %cst_11 = arith.constant 0.000000e+00 : f32
    %25 = vector.shape_cast %17 : vector<1x128xi1> to vector<1x128xi1>
    %26 = vector.broadcast %25 : vector<1x128xi1> to vector<64x128xi1>
    %27 = vector.broadcast %cst_11 : f32 to vector<64x128xf32>
    %28 = arith.select %26, %24, %27 : vector<64x128xi1>, vector<64x128xf32>
    %cst_12 = arith.constant dense<0.000000e+00> : vector<64xf32>
    %29 = vector.multi_reduction <add>, %28, %cst_12 [1] : vector<64x128xf32> to vector<64xf32>
    %30 = vector.shape_cast %29 : vector<64xf32> to vector<64x1xf32>
    %c8_i32_13 = arith.constant 8 : i32
    %31 = vector.broadcast %c8_i32_13 : i32 to vector<1x128xi32>
    %32 = arith.cmpi eq, %12, %31 : vector<1x128xi32>
    %33 = vector.shape_cast %32 : vector<1x128xi1> to vector<1x128xi1>
    %34 = vector.broadcast %33 : vector<1x128xi1> to vector<64x128xi1>
    %35 = vector.shape_cast %30 : vector<64x1xf32> to vector<64x1xf32>
    %36 = vector.broadcast %35 : vector<64x1xf32> to vector<64x128xf32>
    %37 = arith.select %34, %36, %11 : vector<64x128xi1>, vector<64x128xf32>
    %c0_14 = arith.constant 0 : index
    %c0_15 = arith.constant 0 : index
    %38 = vector.load %arg6[%c0_14, %c0_15] : memref<64x128xf32, #tpu.memory_space<vmem>>, vector<64x128xf32>
    tpu.vector_store %arg6[%c0_14, %c0_15], %37 {strides = array<i32>} : memref<64x128xf32, #tpu.memory_space<vmem>>, vector<64x128xf32>,
    return
  }
  func.func @transform_0(%arg0: i32) -> (i32, i32) {
    %c0_i32 = arith.constant 0 : i32
    %c0_i32_0 = arith.constant 0 : i32
    return %arg0, %c0_i32 : i32, i32
  }
  func.func @transform_1(%arg0: i32) -> (i32, i32) {
    %c0_i32 = arith.constant 0 : i32
    %c0_i32_0 = arith.constant 0 : i32
    %c0_i32_1 = arith.constant 0 : i32
    return %c0_i32, %c0_i32_0 : i32, i32
  }
  func.func @transform_2(%arg0: i32) -> (i32, i32) {
    %c0_i32 = arith.constant 0 : i32
    %c0_i32_0 = arith.constant 0 : i32
    %c0_i32_1 = arith.constant 0 : i32
    return %c0_i32, %c0_i32_0 : i32, i32
  }
  func.func @transform_3(%arg0: i32) -> (i32, i32) {
    %c0_i32 = arith.constant 0 : i32
    %c0_i32_0 = arith.constant 0 : i32
    %c0_i32_1 = arith.constant 0 : i32
    return %c0_i32, %c0_i32_0 : i32, i32
  }
  func.func @transform_4(%arg0: i32) -> (i32, i32) {
    %c0_i32 = arith.constant 0 : i32
    %c0_i32_0 = arith.constant 0 : i32
    return %arg0, %c0_i32 : i32, i32
  }
  func.func @transform_5(%arg0: i32) -> (i32, i32) {
    %c0_i32 = arith.constant 0 : i32
    %c0_i32_0 = arith.constant 0 : i32
    return %arg0, %c0_i32 : i32, i32
  }
}

</mosaic_0001>

<llo_original>
// kernel: tpu_custom_call.1
$region0: #{tpu_custom_call.1}
  #allocation0 [shape = 'u32[]', space=smem, size = 0x4, offset = 0x4, fixed_abs, tag = 'smem constant byte address 0x4 - core index']
  #allocation1 [shape = 'u32[144,128]{1,0:T(1,128)}', space=vmem, size = 0x12000, scoped, tag = 'internal scratch']
  %s0 = inlined_call_operand.vmem [shape: f32[64,16], index: 0, kind: input, shape index: {}]
  %s1 = inlined_call_operand.vmem [shape: f32[16,128], index: 1, kind: input, shape index: {}]
  %s2 = inlined_call_operand.vmem [shape: f32[1,128], index: 2, kind: input, shape index: {}]
  %s3 = inlined_call_operand.vmem [shape: f32[1,128], index: 3, kind: input, shape index: {}]
  %s4 = inlined_call_operand.vmem [shape: f32[64,128], index: 4, kind: input, shape index: {}]
  %s5 = inlined_call_operand.hbm [shape: f32[64,128], index: 5, kind: output, shape index: {}]
  %s6 = sld [smem:[#allocation0]]
  $region30: #{tpu_custom_call.1} parent=0
    _
  %s8 = ssub.s32 1, %s6
  %s9 = scalar_select 0, %s8, %s6
  $region1: #{tpu_custom_call.1} parent=0
    #allocation2 [shape = 'u8[32768]{0}', space=vmem, size = 0x8000, scoped, tag = 'output window, operand 0, single buffered']
    #allocation3 [shape = 's32[1]{0}', space=sflag, size = 0x4, scoped, tag = 'scoped memory for tpu_custom_call.1']
    %10 = vsyncpa [#allocation3], 0
    // Predicated region
    $region2: #{tpu_custom_call.1} parent=1 // pred_check
      _
    $region3: #{tpu_custom_call.1} parent=1 // pred_check_branch
      %12 = sbr.rel (0) target = $region5
    $region4: #{tpu_custom_call.1} parent=1 // pred_region
      _
    $region5: #{tpu_custom_call.1} parent=1 // pred_fallthru
      _
    // Predicated region
    $region6: #{tpu_custom_call.1} parent=1 // pred_check
      _
    $region7: #{tpu_custom_call.1} parent=1 // pred_check_branch
      %14 = sbr.rel (0) target = $region9
    $region8: #{tpu_custom_call.1} parent=1 // pred_region
      _
    $region9: #{tpu_custom_call.1} parent=1 // pred_fallthru
      _
    // Predicated region
    $region10: #{tpu_custom_call.1} parent=1 // pred_check
      _
    $region11: #{tpu_custom_call.1} parent=1 // pred_check_branch
      %16 = sbr.rel (0) target = $region13
    $region12: #{tpu_custom_call.1} parent=1 // pred_region
      _
    $region13: #{tpu_custom_call.1} parent=1 // pred_fallthru
      _
    // Predicated region
    $region14: #{tpu_custom_call.1} parent=1 // pred_check
      _
    $region15: #{tpu_custom_call.1} parent=1 // pred_check_branch
      %18 = sbr.rel (0) target = $region17
    $region16: #{tpu_custom_call.1} parent=1 // pred_region
      _
    $region17: #{tpu_custom_call.1} parent=1 // pred_fallthru
      _
    // Predicated region
    $region18: #{tpu_custom_call.1} parent=1 // pred_check
      _
    $region19: #{tpu_custom_call.1} parent=1 // pred_check_branch
      %20 = sbr.rel (0) target = $region21
    $region20: #{tpu_custom_call.1} parent=1 // pred_region
      _
    $region21: #{tpu_custom_call.1} parent=1 // pred_fallthru
      _
    %v21 = vld [vmem:[%s0] sm:$0xff]
    %v22 = vld [vmem:[%s0 + $0x8] sm:$0xff]
    %v23 = vld [vmem:[%s0 + $0x10] sm:$0xff]
    %v24 = vld [vmem:[%s0 + $0x18] sm:$0xff]
    %v25 = vld [vmem:[%s0 + $0x20] sm:$0xff]
    %v26 = vld [vmem:[%s0 + $0x28] sm:$0xff]
    %v27 = vld [vmem:[%s0 + $0x30] sm:$0xff]
    %v28 = vld [vmem:[%s0 + $0x38] sm:$0xff]
    %v29 = vld [vmem:[%s1] sm:$0xff]
    %v30 = vld [vmem:[%s1 + $0x8] sm:$0xff]
    %v31 = vld [vmem:[%s2] sm:$0x1]
    %v33 = vlaneseq
    %v34 = vshrl.u32 %v33, 7
    %v35 = vsub.s32 0, %v34
    %v36 = vrot.slane %v31, %v35
    %vm38 = vcmask 130048
    %v40 = vsel %vm38, %v21, 0
    %v43 = vsel %vm38, %v22, 0
    %v46 = vsel %vm38, %v23, 0
    %v49 = vsel %vm38, %v24, 0
    %v52 = vsel %vm38, %v25, 0
    %v55 = vsel %vm38, %v26, 0
    %v58 = vsel %vm38, %v27, 0
    %v61 = vsel %vm38, %v28, 0
    %63 = vmatprep.subr.mxu0 0.0
    %64 = vmatpush1.msra.mxu0 0.0
    %65 = vmatprep.subr.mxu0 0.0
    %66 = vmatpush1.msra.mxu0 0.0
    %67 = vmatprep.subr.mxu0 0.0
    %68 = vmatpush1.msra.mxu0 0.0
    %69 = vmatprep.subr.mxu0 0.0
    %70 = vmatpush1.msra.mxu0 0.0
    %71 = vmatprep.subr.mxu0 0.0
    %72 = vmatpush1.msra.mxu0 0.0
    %73 = vmatprep.subr.mxu0 0.0
    %74 = vmatpush1.msra.mxu0 0.0
    %75 = vmatprep.subr.mxu0 0.0
    %76 = vmatpush1.msra.mxu0 0.0
    %77 = vmatprep.subr.mxu0 0.0
    %78 = vmatpush1.msra.mxu0 0.0
    %79 = vmatprep.subr.mxu0 0.0
    %80 = vmatpush1.msra.mxu0 0.0
    %81 = vmatprep.subr.mxu0 0.0
    %82 = vmatpush1.msra.mxu0 0.0
    %83 = vmatprep.subr.mxu0 0.0
    %84 = vmatpush1.msra.mxu0 0.0
    %85 = vmatprep.subr.mxu0 0.0
    %86 = vmatpush1.msra.mxu0 0.0
    %87 = vmatprep.subr.mxu0 0.0
    %88 = vmatpush1.msra.mxu0 0.0
    %89 = vmatprep.subr.mxu0 0.0
    %90 = vmatpush1.msra.mxu0 0.0
    %91 = vmatprep.subr.mxu0 0.0
    %92 = vmatpush1.msra.mxu0 %v30
    %93 = vmatprep.subr.mxu0 0.0
    %94 = vmatpush1.msra.mxu0 %v29
    %95 = vmatprep.subr.mxu0 0.0
    %96 = vmatpush2.msra.mxu0 0.0
    %97 = vmatprep.subr.mxu0 0.0
    %98 = vmatpush2.msra.mxu0 0.0
    %99 = vmatprep.subr.mxu0 0.0
    %100 = vmatpush2.msra.mxu0 0.0
    %101 = vmatprep.subr.mxu0 0.0
    %102 = vmatpush2.msra.mxu0 0.0
    %103 = vmatprep.subr.mxu0 0.0
    %104 = vmatpush2.msra.mxu0 0.0
    %105 = vmatprep.subr.mxu0 0.0
    %106 = vmatpush2.msra.mxu0 0.0
    %107 = vmatprep.subr.mxu0 0.0
    %108 = vmatpush2.msra.mxu0 0.0
    %109 = vmatprep.subr.mxu0 0.0
    %110 = vmatpush2.msra.mxu0 0.0
    %111 = vmatprep.subr.mxu0 0.0
    %112 = vmatpush2.msra.mxu0 0.0
    %113 = vmatprep.subr.mxu0 0.0
    %114 = vmatpush2.msra.mxu0 0.0
    %115 = vmatprep.subr.mxu0 0.0
    %116 = vmatpush2.msra.mxu0 0.0
    %117 = vmatprep.subr.mxu0 0.0
    %118 = vmatpush2.msra.mxu0 0.0
    %119 = vmatprep.subr.mxu0 0.0
    %120 = vmatpush2.msra.mxu0 0.0
    %121 = vmatprep.subr.mxu0 0.0
    %122 = vmatpush2.msra.mxu0 0.0
    %123 = vmatprep.subr.mxu0 0.0
    %124 = vmatpush2.msra.mxu0 0.0
    %125 = vmatprep.subr.mxu0 0.0
    %126 = vmatpush2.msra.mxu0 0.0
    %127 = vmatprep.mubr.f32.mxu0 0.0
    %128 = vmatmul.mubr.f32.gmra.mxu0 %v40
    %v129 = vpop.f32.mrf.mxu0
    %v130 = vadd.f32 %v36, %v129
    %v131 = vpop.f32.mrf.mxu0
    %132 = vmatprep.mubr.f32.mxu0 0.0
    %133 = vmatmul.mubr.f32.gmra.mxu0 %v43
    %v134 = vpop.f32.mrf.mxu0
    %v135 = vadd.f32 %v36, %v134
    %v136 = vpop.f32.mrf.mxu0
    %137 = vmatprep.mubr.f32.mxu0 0.0
    %138 = vmatmul.mubr.f32.gmra.mxu0 %v46
    %v139 = vpop.f32.mrf.mxu0
    %v140 = vadd.f32 %v36, %v139
    %v141 = vpop.f32.mrf.mxu0
    %142 = vmatprep.mubr.f32.mxu0 0.0
    %143 = vmatmul.mubr.f32.gmra.mxu0 %v49
    %v144 = vpop.f32.mrf.mxu0
    %v145 = vadd.f32 %v36, %v144
    %v146 = vpop.f32.mrf.mxu0
    %147 = vmatprep.mubr.f32.mxu0 0.0
    %148 = vmatmul.mubr.f32.gmra.mxu0 %v52
    %v149 = vpop.f32.mrf.mxu0
    %v150 = vadd.f32 %v36, %v149
    %v151 = vpop.f32.mrf.mxu0
    %152 = vmatprep.mubr.f32.mxu0 0.0
    %153 = vmatmul.mubr.f32.gmra.mxu0 %v55
    %v154 = vpop.f32.mrf.mxu0
    %v155 = vadd.f32 %v36, %v154
    %v156 = vpop.f32.mrf.mxu0
    %157 = vmatprep.mubr.f32.mxu0 0.0
    %158 = vmatmul.mubr.f32.gmra.mxu0 %v58
    %v159 = vpop.f32.mrf.mxu0
    %v160 = vadd.f32 %v36, %v159
    %v161 = vpop.f32.mrf.mxu0
    %162 = vmatprep.mubr.f32.mxu0 0.0
    %163 = vmatmul.mubr.f32.gmra.mxu0 %v61
    %v164 = vpop.f32.mrf.mxu0
    %v165 = vadd.f32 %v36, %v164
    %v166 = vpop.f32.mrf.mxu0
    %167 = vdwg.mxu0
    %v168 = vld [vmem:[%s3] sm:$0x1]
    %v169 = vmul.f32 %v168, 1.442695
    %v170 = vpow.pop %v169
    %v171 = vld [vmem:[%s4] sm:$0xff]
    %v172 = vld [vmem:[%s4 + $0x8] sm:$0xff]
    %v173 = vld [vmem:[%s4 + $0x10] sm:$0xff]
    %v174 = vld [vmem:[%s4 + $0x18] sm:$0xff]
    %v175 = vld [vmem:[%s4 + $0x20] sm:$0xff]
    %v176 = vld [vmem:[%s4 + $0x28] sm:$0xff]
    %v177 = vld [vmem:[%s4 + $0x30] sm:$0xff]
    %v178 = vld [vmem:[%s4 + $0x38] sm:$0xff]
    %v180 = vlaneseq
    %v181 = vshrl.u32 %v180, 7
    %v182 = vsub.s32 0, %v181
    %v183 = vrot.slane %v170, %v182
    %v185 = vmul.f32 %v183, %v171
    %v186 = vmul.f32 %v183, %v172
    %v187 = vmul.f32 %v183, %v173
    %v188 = vmul.f32 %v183, %v174
    %v189 = vmul.f32 %v183, %v175
    %v190 = vmul.f32 %v183, %v176
    %v191 = vmul.f32 %v183, %v177
    %v192 = vmul.f32 %v183, %v178
    %v193 = vadd.f32 %v130, %v185
    %v194 = vadd.f32 %v135, %v186
    %v195 = vadd.f32 %v140, %v187
    %v196 = vadd.f32 %v145, %v188
    %v197 = vadd.f32 %v150, %v189
    %v198 = vadd.f32 %v155, %v190
    %v199 = vadd.f32 %v160, %v191
    %v200 = vadd.f32 %v165, %v192
    %v201 = vlaneseq
    %v202 = vand.u32 %v201, 127
    %vm203 = vcmp.ge.s32.totalorder %v202, 4
    %vm204 = vcmp.lt.s32.totalorder %v202, 8
    %vm205 = vmand %vm203, %vm204
    %v206 = vmul.f32 %v171, %v171
    %v207 = vmul.f32 %v172, %v172
    %v208 = vmul.f32 %v173, %v173
    %v209 = vmul.f32 %v174, %v174
    %v210 = vmul.f32 %v175, %v175
    %v211 = vmul.f32 %v176, %v176
    %v212 = vmul.f32 %v177, %v177
    %v213 = vmul.f32 %v178, %v178
    %v214 = vmul.f32 %v206, -0.5
    %v215 = vmul.f32 %v207, -0.5
    %v216 = vmul.f32 %v208, -0.5
    %v217 = vmul.f32 %v209, -0.5
    %v218 = vmul.f32 %v210, -0.5
    %v219 = vmul.f32 %v211, -0.5
    %v220 = vmul.f32 %v212, -0.5
    %v221 = vmul.f32 %v213, -0.5
    %v223 = vlaneseq
    %v224 = vshrl.u32 %v223, 7
    %v225 = vsub.s32 0, %v224
    %v226 = vrot.slane %v168, %v225
    %v228 = vsub.f32 %v214, %v226
    %v229 = vsub.f32 %v215, %v226
    %v230 = vsub.f32 %v216, %v226
    %v231 = vsub.f32 %v217, %v226
    %v232 = vsub.f32 %v218, %v226
    %v233 = vsub.f32 %v219, %v226
    %v234 = vsub.f32 %v220, %v226
    %v235 = vsub.f32 %v221, %v226
    %v236 = vsub.f32 %v228, 0.9189385
    %v237 = vsub.f32 %v229, 0.9189385
    %v238 = vsub.f32 %v230, 0.9189385
    %v239 = vsub.f32 %v231, 0.9189385
    %v240 = vsub.f32 %v232, 0.9189385
    %v241 = vsub.f32 %v233, 0.9189385
    %v242 = vsub.f32 %v234, 0.9189385
    %v243 = vsub.f32 %v235, 0.9189385
    %v244 = vsel %vm205, 1, 0
    %vm245 = vcmp.eq.s32.totalorder %v244, 1
    %v246 = vsel %vm245, %v236, 0.0
    %v247 = vsel %vm245, %v237, 0.0
    %v248 = vsel %vm245, %v238, 0.0
    %v249 = vsel %vm245, %v239, 0.0
    %v250 = vsel %vm245, %v240, 0.0
    %v251 = vsel %vm245, %v241, 0.0
    %v252 = vsel %vm245, %v242, 0.0
    %v253 = vsel %vm245, %v243, 0.0
    %254 = vadd.xlane.f32.xlu0 %v246
    %v255 = vpop.xlane.xlu0 %254
    %256 = vadd.xlane.f32.xlu0 %v247
    %v257 = vpop.xlane.xlu0 %256
    %258 = vadd.xlane.f32.xlu0 %v248
    %v259 = vpop.xlane.xlu0 %258
    %260 = vadd.xlane.f32.xlu0 %v249
    %v261 = vpop.xlane.xlu0 %260
    %262 = vadd.xlane.f32.xlu0 %v250
    %v263 = vpop.xlane.xlu0 %262
    %264 = vadd.xlane.f32.xlu0 %v251
    %v265 = vpop.xlane.xlu0 %264
    %266 = vadd.xlane.f32.xlu0 %v252
    %v267 = vpop.xlane.xlu0 %266
    %268 = vadd.xlane.f32.xlu0 %v253
    %v269 = vpop.xlane.xlu0 %268
    %vm270 = vcmp.eq.s32.totalorder %v202, 8
    %v271 = vsel %vm270, 1, 0
    %vm272 = vcmp.eq.s32.totalorder %v271, 1
    %v273 = vsel %vm272, %v255, %v193
    %v274 = vsel %vm272, %v257, %v194
    %v275 = vsel %vm272, %v259, %v195
    %v276 = vsel %vm272, %v261, %v196
    %v277 = vsel %vm272, %v263, %v197
    %v278 = vsel %vm272, %v265, %v198
    %v279 = vsel %vm272, %v267, %v199
    %v280 = vsel %vm272, %v269, %v200
    %281 = vst [vmem:[#allocation2] sm:$0xff] %v273
    %282 = vst [vmem:[#allocation2 + $0x8] sm:$0xff] %v274
    %283 = vst [vmem:[#allocation2 + $0x10] sm:$0xff] %v275
    %284 = vst [vmem:[#allocation2 + $0x18] sm:$0xff] %v276
    %285 = vst [vmem:[#allocation2 + $0x20] sm:$0xff] %v277
    %286 = vst [vmem:[#allocation2 + $0x28] sm:$0xff] %v278
    %287 = vst [vmem:[#allocation2 + $0x30] sm:$0xff] %v279
    %288 = vst [vmem:[#allocation2 + $0x38] sm:$0xff] %v280
    // Predicated region
    $region22: #{tpu_custom_call.1} parent=1 // pred_check
      _
    $region23: #{tpu_custom_call.1} parent=1 // pred_check_branch
      %290 = sbr.rel (0) target = $region25
    $region24: #{tpu_custom_call.1} parent=1 // pred_region
      %s292 = ssub.s32 1024, 1024
      %293 = vsyncadd [#allocation3], %s292
      %s294 = sshll.u32 [#allocation2], 4
      %s295 = int_to_ptr.vmem [resolvable:$true] %s294
      %300 = dma.vmem_to_hbm [thread:$0]  %s295, 1024, %s5, [#allocation3], 128, 128, 8
    $region25: #{tpu_custom_call.1} parent=1 // pred_fallthru
      _
    // Predicated region
    $region26: #{tpu_custom_call.1} parent=1 // pred_check
      _
    $region27: #{tpu_custom_call.1} parent=1 // pred_check_branch
      %302 = sbr.rel (0) target = $region29
    $region28: #{tpu_custom_call.1} parent=1 // pred_region
      %303 = dma.done [#allocation3], 1024
    $region29: #{tpu_custom_call.1} parent=1 // pred_fallthru
      _
    %304 = vsyncpa [#allocation3], 1

</llo_original>
